<compile_context>
chip_gen: v5e
topology: v5e:2x2
jax: 0.10.0
libtpu: 0.0.40
codegen_flags: <defaults>
</compile_context>

<pallas_src>
import jax
import jax.numpy as jnp
from jax import lax
from jax.experimental import pallas as pl
from jax.experimental.pallas import tpu as pltpu


def _round_up(x, m):
    return ((x + m - 1) // m) * m


def _neuralnet_kernel(ids_ref, s1_ref, s2_ref, out_ref):
    # ids_ref: [TB, S]        int32 token ids (batch tile)
    # s1_ref : [V+1, H+1] f32 (rows 0..V-1 = emb_table@W1, row V = b1;
    #                          col H = "ones generator": 0 everywhere, 1 at [V,H])
    # s2_ref : [H+1, Cp]  f32 (rows 0..H-1 = W2 padded to 128 classes, row H = b2;
    #                          padded class columns carry a -1e30 bias)
    # out_ref: [TB, Cp]   f32 log-probabilities (padded classes sliced off outside)
    TB, S = ids_ref.shape
    Vp1 = s1_ref.shape[0]

    # ---- Fused embedding gather + mean (Steps 1+2) -------------------------
    # counts[b, v] = #{s : ids[b, s] == v}; last column pinned at S so the bias
    # row of slab1 contributes exactly b1 after the 1/S scale.
    ids = ids_ref[...]                                              # [TB, S] i32
    vocab_row = lax.broadcasted_iota(jnp.int32, (TB, Vp1), 1)       # hoisted iota
    counts = jnp.where(vocab_row == Vp1 - 1, jnp.float32(S), jnp.float32(0.0))
    # S is static and tiny; each iteration feeds the single [TB, Vp1]
    # accumulator so live ranges stay bounded even at TB=128/256.
    for s in range(S):
        counts = counts + (ids[:, s:s + 1] == vocab_row).astype(jnp.float32)

    # ---- Hidden layer + ReLU (Step 3), bias fused into the matmul ---------
    # h[:, :H] = relu(avg_embed @ W1 + b1);  h[:, H] = relu(1) = 1 (ones col).
    h = jnp.dot(counts, s1_ref[...], preferred_element_type=jnp.float32) * (1.0 / S)
    h = jnp.maximum(h, 0.0)

    # ---- Classifier (bias via the ones column of h) ------------------------
    logits = jnp.dot(h, s2_ref[...], preferred_element_type=jnp.float32)   # [TB, Cp]

    # ---- log_softmax over the (lane-dense) class axis (Step 4) -------------
    # Padded classes sit at -1e30 so exp underflows to 0 and they drop out.
    m = jnp.max(logits, axis=-1, keepdims=True)
    shifted = logits - m
    lse = jnp.log(jnp.sum(jnp.exp(shifted), axis=-1, keepdims=True))
    out_ref[...] = shifted - lse


def neuralnet_forward(token_ids, emb_table, w1, b1, w2, b2, *, batch_tile=128):
    """token_ids: [B, S] int.  Returns [B, C] float32 log-probs."""
    B, S = token_ids.shape
    V, D = emb_table.shape
    H = w1.shape[1]
    C = w2.shape[1]
    Cp = _round_up(C, 128)                      # lane-dense output / MXU-N aligned
    f32 = jnp.float32

    # ---- Slab 1: fused (emb_table @ W1 | b1) with a ones-generator column ---
    tw1 = emb_table.astype(f32) @ w1.astype(f32)                    # [V, H]
    slab1 = jnp.zeros((V + 1, H + 1), f32)
    slab1 = slab1.at[:V, :H].set(tw1)
    slab1 = slab1.at[V, :H].set(b1.reshape(H).astype(f32))
    slab1 = slab1.at[V, H].set(1.0)                                 # -> ones column in h

    # ---- Slab 2: (W2 | b2), classes padded to 128 lanes ---------------------
    slab2 = jnp.zeros((H + 1, Cp), f32)
    slab2 = slab2.at[:H, :C].set(w2.astype(f32))
    slab2 = slab2.at[H, :C].set(b2.reshape(C).astype(f32))
    slab2 = slab2.at[H, C:].set(-1e30)                              # knock padded classes out

    # ---- Batch tiling --------------------------------------------------------
    # Clamp ids like jnp.take under jit; pad batch to a sublane-aligned tile.
    ids = jnp.clip(token_ids.astype(jnp.int32), 0, V - 1)
    Bp8 = _round_up(B, 8)
    tile = max(8, min(_round_up(batch_tile, 8), Bp8))
    if Bp8 >= 16:
        # Guarantee >= 2 grid steps so "parallel" shards across both v7x TCs.
        tile = min(tile, _round_up(pl.cdiv(Bp8, 2), 8))
    Bp = _round_up(Bp8, tile)
    ids = jnp.zeros((Bp, S), jnp.int32).at[:B].set(ids)             # padded rows use id 0

    grid = (Bp // tile,)

    flops = (2 * Bp * (V + 1) * (H + 1)          # counts @ slab1
             + 2 * Bp * (H + 1) * Cp             # h @ slab2
             + Bp * S * (V + 1)                  # one-hot compares
             + 4 * Bp * Cp)                      # softmax arithmetic
    transcendentals = Bp * Cp + Bp               # exp per logit + log per row
    bytes_accessed = 4 * (ids.size + slab1.size + slab2.size + Bp * Cp)

    # Scoped-VMEM estimate: double-buffered ids/out tiles + both slabs + temps.
    vmem_need = 4 * (2 * tile * S + 2 * tile * Cp
                     + 2 * slab1.size + 2 * slab2.size
                     + 3 * tile * max(V + 1, Cp))
    vmem_limit = min(max(2 * vmem_need, 32 * 1024 * 1024), 48 * 1024 * 1024)

    out = pl.pallas_call(
        _neuralnet_kernel,
        out_shape=jax.ShapeDtypeStruct((Bp, Cp), jnp.float32),
        grid=grid,
        in_specs=[
            pl.BlockSpec((tile, S), lambda i: (i, 0)),              # token-id tile
            pl.BlockSpec((V + 1, H + 1), lambda i: (0, 0)),         # fused table@W1 | b1
            pl.BlockSpec((H + 1, Cp), lambda i: (0, 0)),            # W2 | b2 (lane-padded)
        ],
        out_specs=pl.BlockSpec((tile, Cp), lambda i: (i, 0)),
        compiler_params=pltpu.CompilerParams(
            dimension_semantics=("parallel",),
            vmem_limit_bytes=vmem_limit),
        cost_estimate=pl.CostEstimate(
            flops=flops,
            transcendentals=transcendentals,
            bytes_accessed=bytes_accessed),
    )(ids, slab1, slab2)
    return out[:B, :C]


def reference_forward(token_ids, emb_table, w1, b1, w2, b2):
    emb = jnp.take(emb_table, token_ids, axis=0)          # [B, S, D]
    avg = jnp.mean(emb, axis=1)
    h = jnp.maximum(avg @ w1 + b1, 0.0)
    logits = h @ w2 + b2
    return jax.nn.log_softmax(logits, axis=-1)


if __name__ == "__main__":
    # Small, deterministic problem consistent with the module's shapes.
    vocab_size = 50
    embed_dim = 64      # embeddings.embedding_dim
    hidden_dim = 32
    num_classes = 2
    batch = 2
    seq_len = 8

    key = jax.random.PRNGKey(0)
    k_emb, k_w1, k_b1, k_w2, k_b2, k_idx = jax.random.split(key, 6)

    embedding_table = jax.random.normal(k_emb, (vocab_size, embed_dim),
                                        dtype=jnp.float32) * 0.1
    w1 = jax.random.normal(k_w1, (embed_dim, hidden_dim), dtype=jnp.float32) * 0.1
    b1 = jax.random.normal(k_b1, (1, hidden_dim), dtype=jnp.float32) * 0.1
    w2 = jax.random.normal(k_w2, (hidden_dim, num_classes), dtype=jnp.float32) * 0.1
    b2 = jax.random.normal(k_b2, (1, num_classes), dtype=jnp.float32) * 0.1

    # ex_words -> token ids (a batch of token-id sequences).
    token_ids = jax.random.randint(k_idx, (batch, seq_len), 0, vocab_size)

    out = neuralnet_forward(token_ids, embedding_table, w1, b1, w2, b2)
    out = jax.block_until_ready(out)

    ref = reference_forward(token_ids, embedding_table, w1, b1, w2, b2)
    assert out.shape == (batch, num_classes)
    # Kernel fuses table@W1 and runs bias adds through the MXU; the remaining
    # differences are fp reassociation, well under this tolerance.
    assert jnp.allclose(out, ref, atol=1e-4, rtol=1e-4), (out, ref)
    print("KERNEL_OK")
</pallas_src>

<mosaic_0001>
module attributes {stable_mosaic.version = 11 : i64} {
  func.func @_neuralnet_kernel(%arg0: i32, %arg1: memref<8x8xi32, #tpu.memory_space<vmem>>, %arg2: memref<51x33xf32, #tpu.memory_space<vmem>>, %arg3: memref<33x128xf32, #tpu.memory_space<vmem>>, %arg4: memref<8x128xf32, #tpu.memory_space<vmem>>) attributes {dimension_semantics = [#tpu.dimension_semantics<parallel>], iteration_bounds = array<i64: 1>, scalar_prefetch = 0 : i64, scratch_operands = 0 : i64, tpu.core_type = #tpu.core_type<tc>, window_params = [{transform_indices = @transform_0, window_bounds = array<i64: 8, 8>}, {pipeline_mode = #tpu.pipeline_mode<synchronous>, transform_indices = @transform_1, window_bounds = array<i64: 51, 33>}, {pipeline_mode = #tpu.pipeline_mode<synchronous>, transform_indices = @transform_2, window_bounds = array<i64: 33, 128>}, {transform_indices = @transform_3, window_bounds = array<i64: 8, 128>}]} {
    %c0 = arith.constant 0 : index
    %c0_0 = arith.constant 0 : index
    %0 = vector.load %arg1[%c0, %c0_0] : memref<8x8xi32, #tpu.memory_space<vmem>>, vector<8x8xi32>
    %1 = tpu.iota {dimensions = array<i32: 1>} : vector<8x51xi32>
    %c50_i32 = arith.constant 50 : i32
    %2 = vector.broadcast %c50_i32 : i32 to vector<8x51xi32>
    %3 = arith.cmpi eq, %1, %2 : vector<8x51xi32>
    %cst = arith.constant 8.000000e+00 : f32
    %cst_1 = arith.constant 0.000000e+00 : f32
    %4 = vector.broadcast %cst : f32 to vector<8x51xf32>
    %5 = vector.broadcast %cst_1 : f32 to vector<8x51xf32>
    %6 = arith.select %3, %4, %5 : vector<8x51xi1>, vector<8x51xf32>
    %7 = vector.extract_strided_slice %0 {offsets = [0, 0], sizes = [8, 1], strides = [1, 1]} : vector<8x8xi32> to vector<8x1xi32>
    %8 = vector.broadcast %7 : vector<8x1xi32> to vector<8x51xi32>
    %9 = arith.cmpi eq, %8, %1 : vector<8x51xi32>
    %10 = arith.extui %9 : vector<8x51xi1> to vector<8x51xi32>
    %11 = arith.sitofp %10 : vector<8x51xi32> to vector<8x51xf32>
    %12 = arith.addf %6, %11 : vector<8x51xf32>
    %13 = vector.extract_strided_slice %0 {offsets = [0, 1], sizes = [8, 1], strides = [1, 1]} : vector<8x8xi32> to vector<8x1xi32>
    %14 = vector.broadcast %13 : vector<8x1xi32> to vector<8x51xi32>
    %15 = arith.cmpi eq, %14, %1 : vector<8x51xi32>
    %16 = arith.extui %15 : vector<8x51xi1> to vector<8x51xi32>
    %17 = arith.sitofp %16 : vector<8x51xi32> to vector<8x51xf32>
    %18 = arith.addf %12, %17 : vector<8x51xf32>
    %19 = vector.extract_strided_slice %0 {offsets = [0, 2], sizes = [8, 1], strides = [1, 1]} : vector<8x8xi32> to vector<8x1xi32>
    %20 = vector.broadcast %19 : vector<8x1xi32> to vector<8x51xi32>
    %21 = arith.cmpi eq, %20, %1 : vector<8x51xi32>
    %22 = arith.extui %21 : vector<8x51xi1> to vector<8x51xi32>
    %23 = arith.sitofp %22 : vector<8x51xi32> to vector<8x51xf32>
    %24 = arith.addf %18, %23 : vector<8x51xf32>
    %25 = vector.extract_strided_slice %0 {offsets = [0, 3], sizes = [8, 1], strides = [1, 1]} : vector<8x8xi32> to vector<8x1xi32>
    %26 = vector.broadcast %25 : vector<8x1xi32> to vector<8x51xi32>
    %27 = arith.cmpi eq, %26, %1 : vector<8x51xi32>
    %28 = arith.extui %27 : vector<8x51xi1> to vector<8x51xi32>
    %29 = arith.sitofp %28 : vector<8x51xi32> to vector<8x51xf32>
    %30 = arith.addf %24, %29 : vector<8x51xf32>
    %31 = vector.extract_strided_slice %0 {offsets = [0, 4], sizes = [8, 1], strides = [1, 1]} : vector<8x8xi32> to vector<8x1xi32>
    %32 = vector.broadcast %31 : vector<8x1xi32> to vector<8x51xi32>
    %33 = arith.cmpi eq, %32, %1 : vector<8x51xi32>
    %34 = arith.extui %33 : vector<8x51xi1> to vector<8x51xi32>
    %35 = arith.sitofp %34 : vector<8x51xi32> to vector<8x51xf32>
    %36 = arith.addf %30, %35 : vector<8x51xf32>
    %37 = vector.extract_strided_slice %0 {offsets = [0, 5], sizes = [8, 1], strides = [1, 1]} : vector<8x8xi32> to vector<8x1xi32>
    %38 = vector.broadcast %37 : vector<8x1xi32> to vector<8x51xi32>
    %39 = arith.cmpi eq, %38, %1 : vector<8x51xi32>
    %40 = arith.extui %39 : vector<8x51xi1> to vector<8x51xi32>
    %41 = arith.sitofp %40 : vector<8x51xi32> to vector<8x51xf32>
    %42 = arith.addf %36, %41 : vector<8x51xf32>
    %43 = vector.extract_strided_slice %0 {offsets = [0, 6], sizes = [8, 1], strides = [1, 1]} : vector<8x8xi32> to vector<8x1xi32>
    %44 = vector.broadcast %43 : vector<8x1xi32> to vector<8x51xi32>
    %45 = arith.cmpi eq, %44, %1 : vector<8x51xi32>
    %46 = arith.extui %45 : vector<8x51xi1> to vector<8x51xi32>
    %47 = arith.sitofp %46 : vector<8x51xi32> to vector<8x51xf32>
    %48 = arith.addf %42, %47 : vector<8x51xf32>
    %49 = vector.extract_strided_slice %0 {offsets = [0, 7], sizes = [8, 1], strides = [1, 1]} : vector<8x8xi32> to vector<8x1xi32>
    %50 = vector.broadcast %49 : vector<8x1xi32> to vector<8x51xi32>
    %51 = arith.cmpi eq, %50, %1 : vector<8x51xi32>
    %52 = arith.extui %51 : vector<8x51xi1> to vector<8x51xi32>
    %53 = arith.sitofp %52 : vector<8x51xi32> to vector<8x51xf32>
    %54 = arith.addf %48, %53 : vector<8x51xf32>
    %c0_2 = arith.constant 0 : index
    %c0_3 = arith.constant 0 : index
    %55 = vector.load %arg2[%c0_2, %c0_3] : memref<51x33xf32, #tpu.memory_space<vmem>>, vector<51x33xf32>
    %cst_4 = arith.constant dense<0.000000e+00> : vector<8x33xf32>
    %56 = tpu.matmul %54, %55, %cst_4 {dimension_numbers = #tpu.dot_dimension_numbers<[1], [0], [0], [1], [0, 0, 1, 1], [], []>} : vector<8x51xf32>, vector<51x33xf32>, vector<8x33xf32> -> vector<8x33xf32>
    %cst_5 = arith.constant 1.250000e-01 : f32
    %57 = vector.broadcast %cst_5 : f32 to vector<8x33xf32>
    %58 = arith.mulf %56, %57 : vector<8x33xf32>
    %cst_6 = arith.constant 0.000000e+00 : f32
    %59 = vector.broadcast %cst_6 : f32 to vector<8x33xf32>
    %60 = arith.maximumf %58, %59 : vector<8x33xf32>
    %c0_7 = arith.constant 0 : index
    %c0_8 = arith.constant 0 : index
    %61 = vector.load %arg3[%c0_7, %c0_8] : memref<33x128xf32, #tpu.memory_space<vmem>>, vector<33x128xf32>
    %cst_9 = arith.constant dense<0.000000e+00> : vector<8x128xf32>
    %62 = tpu.matmul %60, %61, %cst_9 {dimension_numbers = #tpu.dot_dimension_numbers<[1], [0], [0], [1], [0, 0, 1, 1], [], []>} : vector<8x33xf32>, vector<33x128xf32>, vector<8x128xf32> -> vector<8x128xf32>
    %cst_10 = arith.constant dense<0xFF800000> : vector<8xf32>
    %63 = vector.multi_reduction <maximumf>, %62, %cst_10 [1] : vector<8x128xf32> to vector<8xf32>
    %64 = vector.shape_cast %63 : vector<8xf32> to vector<8x1xf32>
    %65 = vector.broadcast %64 : vector<8x1xf32> to vector<8x128xf32>
    %66 = arith.subf %62, %65 : vector<8x128xf32>
    %67 = math.exp %66 : vector<8x128xf32>
    %cst_11 = arith.constant dense<0.000000e+00> : vector<8xf32>
    %68 = vector.multi_reduction <add>, %67, %cst_11 [1] : vector<8x128xf32> to vector<8xf32>
    %69 = vector.shape_cast %68 : vector<8xf32> to vector<8x1xf32>
    %70 = math.log %69 : vector<8x1xf32>
    %71 = vector.broadcast %70 : vector<8x1xf32> to vector<8x128xf32>
    %72 = arith.subf %66, %71 : vector<8x128xf32>
    %c0_12 = arith.constant 0 : index
    %c0_13 = arith.constant 0 : index
    %73 = vector.load %arg4[%c0_12, %c0_13] : memref<8x128xf32, #tpu.memory_space<vmem>>, vector<8x128xf32>
    tpu.vector_store %arg4[%c0_12, %c0_13], %72 {strides = array<i32>} : memref<8x128xf32, #tpu.memory_space<vmem>>, vector<8x128xf32>,
    return
  }
  func.func @transform_0(%arg0: i32) -> (i32, i32) {
    %c0_i32 = arith.constant 0 : i32
    %c0_i32_0 = arith.constant 0 : i32
    return %arg0, %c0_i32 : i32, i32
  }
  func.func @transform_1(%arg0: i32) -> (i32, i32) {
    %c0_i32 = arith.constant 0 : i32
    %c0_i32_0 = arith.constant 0 : i32
    %c0_i32_1 = arith.constant 0 : i32
    return %c0_i32, %c0_i32_0 : i32, i32
  }
  func.func @transform_2(%arg0: i32) -> (i32, i32) {
    %c0_i32 = arith.constant 0 : i32
    %c0_i32_0 = arith.constant 0 : i32
    %c0_i32_1 = arith.constant 0 : i32
    return %c0_i32, %c0_i32_0 : i32, i32
  }
  func.func @transform_3(%arg0: i32) -> (i32, i32) {
    %c0_i32 = arith.constant 0 : i32
    %c0_i32_0 = arith.constant 0 : i32
    return %arg0, %c0_i32 : i32, i32
  }
}

</mosaic_0001>

<llo_original>
// kernel: tpu_custom_call.1
$region0: #{tpu_custom_call.1}
  #allocation0 [shape = 'u32[]', space=smem, size = 0x4, offset = 0x4, fixed_abs, tag = 'smem constant byte address 0x4 - core index']
  #allocation1 [shape = 'u32[72,128]{1,0:T(1,128)}', space=vmem, size = 0x9000, scoped, tag = 'internal scratch']
  %s0 = inlined_call_operand.vmem [shape: s32[8,8], index: 0, kind: input, shape index: {}]
  %s1 = inlined_call_operand.vmem [shape: f32[51,33], index: 1, kind: input, shape index: {}]
  %s2 = inlined_call_operand.vmem [shape: f32[33,128], index: 2, kind: input, shape index: {}]
  %s3 = inlined_call_operand.hbm [shape: f32[8,128], index: 3, kind: output, shape index: {}]
  %s4 = sld [smem:[#allocation0]]
  $region22: #{tpu_custom_call.1} parent=0
    _
  %s6 = ssub.s32 1, %s4
  %s7 = scalar_select 0, %s6, %s4
  $region1: #{tpu_custom_call.1} parent=0
    #allocation2 [shape = 'u8[4096]{0}', space=vmem, size = 0x1000, scoped, tag = 'output window, operand 0, single buffered']
    #allocation3 [shape = 's32[1]{0}', space=sflag, size = 0x4, scoped, tag = 'scoped memory for tpu_custom_call.1']
    %8 = vsyncpa [#allocation3], 0
    // Predicated region
    $region2: #{tpu_custom_call.1} parent=1 // pred_check
      _
    $region3: #{tpu_custom_call.1} parent=1 // pred_check_branch
      %10 = sbr.rel (0) target = $region5
    $region4: #{tpu_custom_call.1} parent=1 // pred_region
      _
    $region5: #{tpu_custom_call.1} parent=1 // pred_fallthru
      _
    // Predicated region
    $region6: #{tpu_custom_call.1} parent=1 // pred_check
      _
    $region7: #{tpu_custom_call.1} parent=1 // pred_check_branch
      %12 = sbr.rel (0) target = $region9
    $region8: #{tpu_custom_call.1} parent=1 // pred_region
      _
    $region9: #{tpu_custom_call.1} parent=1 // pred_fallthru
      _
    // Predicated region
    $region10: #{tpu_custom_call.1} parent=1 // pred_check
      _
    $region11: #{tpu_custom_call.1} parent=1 // pred_check_branch
      %14 = sbr.rel (0) target = $region13
    $region12: #{tpu_custom_call.1} parent=1 // pred_region
      _
    $region13: #{tpu_custom_call.1} parent=1 // pred_fallthru
      _
    %v15 = vld [vmem:[%s0] sm:$0xff]
    %v16 = vlaneseq
    %v17 = vand.u32 %v16, 127
    %vm18 = vcmp.eq.s32.totalorder %v17, 50
    %v19 = vsel %vm18, 8.0, 0.0
    %20 = vset.pattern.permute.xlu0 0
    %21 = vperm.xlu0 %20, %v15
    %v22 = vpop.permute.xlu0 %21
    %vm23 = vcmp.eq.s32.totalorder %v22, %v17
    %v24 = vsel %vm23, 1, 0
    %v25 = vcvt.s32.f32 %v24
    %v26 = vadd.f32 %v19, %v25
    %27 = vset.pattern.permute.xlu0 1
    %28 = vperm.xlu0 %27, %v15
    %v29 = vpop.permute.xlu0 %28
    %vm30 = vcmp.eq.s32.totalorder %v29, %v17
    %v31 = vsel %vm30, 1, 0
    %v32 = vcvt.s32.f32 %v31
    %v33 = vadd.f32 %v26, %v32
    %34 = vset.pattern.permute.xlu0 2
    %35 = vperm.xlu0 %34, %v15
    %v36 = vpop.permute.xlu0 %35
    %vm37 = vcmp.eq.s32.totalorder %v36, %v17
    %v38 = vsel %vm37, 1, 0
    %v39 = vcvt.s32.f32 %v38
    %v40 = vadd.f32 %v33, %v39
    %41 = vset.pattern.permute.xlu0 3
    %42 = vperm.xlu0 %41, %v15
    %v43 = vpop.permute.xlu0 %42
    %vm44 = vcmp.eq.s32.totalorder %v43, %v17
    %v45 = vsel %vm44, 1, 0
    %v46 = vcvt.s32.f32 %v45
    %v47 = vadd.f32 %v40, %v46
    %48 = vset.pattern.permute.xlu0 4
    %49 = vperm.xlu0 %48, %v15
    %v50 = vpop.permute.xlu0 %49
    %vm51 = vcmp.eq.s32.totalorder %v50, %v17
    %v52 = vsel %vm51, 1, 0
    %v53 = vcvt.s32.f32 %v52
    %v54 = vadd.f32 %v47, %v53
    %55 = vset.pattern.permute.xlu0 5
    %56 = vperm.xlu0 %55, %v15
    %v57 = vpop.permute.xlu0 %56
    %vm58 = vcmp.eq.s32.totalorder %v57, %v17
    %v59 = vsel %vm58, 1, 0
    %v60 = vcvt.s32.f32 %v59
    %v61 = vadd.f32 %v54, %v60
    %62 = vset.pattern.permute.xlu0 6
    %63 = vperm.xlu0 %62, %v15
    %v64 = vpop.permute.xlu0 %63
    %vm65 = vcmp.eq.s32.totalorder %v64, %v17
    %v66 = vsel %vm65, 1, 0
    %v67 = vcvt.s32.f32 %v66
    %v68 = vadd.f32 %v61, %v67
    %69 = vset.pattern.permute.xlu0 7
    %70 = vperm.xlu0 %69, %v15
    %v71 = vpop.permute.xlu0 %70
    %vm72 = vcmp.eq.s32.totalorder %v71, %v17
    %v73 = vsel %vm72, 1, 0
    %v74 = vcvt.s32.f32 %v73
    %v75 = vadd.f32 %v68, %v74
    %v76 = vld [vmem:[%s1] sm:$0xff]
    %v77 = vld [vmem:[%s1 + $0x8] sm:$0xff]
    %v78 = vld [vmem:[%s1 + $0x10] sm:$0xff]
    %v79 = vld [vmem:[%s1 + $0x18] sm:$0xff]
    %v80 = vld [vmem:[%s1 + $0x20] sm:$0xff]
    %v81 = vld [vmem:[%s1 + $0x28] sm:$0xff]
    %v82 = vld [vmem:[%s1 + $0x30] sm:$0x7]
    %vm83 = vcmask 416768
    %v85 = vsel %vm83, %v75, 0
    %vm87 = vcmask 1042432
    %v89 = vsel %vm87, %v82, 0
    %91 = vmatpush.msra.mxu0 0.0
    %92 = vmatpush.msra.mxu0 0.0
    %93 = vmatpush.msra.mxu0 0.0
    %94 = vmatpush.msra.mxu0 0.0
    %95 = vmatpush.msra.mxu0 0.0
    %96 = vmatpush.msra.mxu0 0.0
    %97 = vmatpush.msra.mxu0 0.0
    %98 = vmatpush.msra.mxu0 0.0
    %99 = vmatpush.msra.mxu0 0.0
    %100 = vmatpush.msra.mxu0 %v89
    %101 = vmatpush.msra.mxu0 %v81
    %102 = vmatpush.msra.mxu0 %v80
    %103 = vmatpush.msra.mxu0 %v79
    %104 = vmatpush.msra.mxu0 %v78
    %105 = vmatpush.msra.mxu0 %v77
    %106 = vmatpush.msra.mxu0 %v76
    %107 = vmatmul.f32.gmra.mxu0 %v85
    %v108 = vpop.f32.mrf.mxu0
    %v109 = vadd.f32 0.0, %v108
    %110 = vdwg.mxu0
    %v111 = vmul.f32 %v109, 0.125
    %v112 = vmax.f32 %v111, 0.0
    %v113 = vld [vmem:[%s2] sm:$0xff]
    %v114 = vld [vmem:[%s2 + $0x8] sm:$0xff]
    %v115 = vld [vmem:[%s2 + $0x10] sm:$0xff]
    %v116 = vld [vmem:[%s2 + $0x18] sm:$0xff]
    %v117 = vld [vmem:[%s2 + $0x20] sm:$0x1]
    %vm118 = vcmask 269312
    %v120 = vsel %vm118, %v112, 0
    %vm122 = vcmask 1040384
    %v124 = vsel %vm122, %v117, 0
    %126 = vmatpush.msra.mxu0 0.0
    %127 = vmatpush.msra.mxu0 0.0
    %128 = vmatpush.msra.mxu0 0.0
    %129 = vmatpush.msra.mxu0 0.0
    %130 = vmatpush.msra.mxu0 0.0
    %131 = vmatpush.msra.mxu0 0.0
    %132 = vmatpush.msra.mxu0 0.0
    %133 = vmatpush.msra.mxu0 0.0
    %134 = vmatpush.msra.mxu0 0.0
    %135 = vmatpush.msra.mxu0 0.0
    %136 = vmatpush.msra.mxu0 0.0
    %137 = vmatpush.msra.mxu0 %v124
    %138 = vmatpush.msra.mxu0 %v116
    %139 = vmatpush.msra.mxu0 %v115
    %140 = vmatpush.msra.mxu0 %v114
    %141 = vmatpush.msra.mxu0 %v113
    %142 = vmatmul.f32.gmra.mxu0 %v120
    %v143 = vpop.f32.mrf.mxu0
    %v144 = vadd.f32 0.0, %v143
    %145 = vdwg.mxu0
    %146 = vmax.xlane.f32.xlu0 %v144
    %v147 = vpop.xlane.xlu0 %146
    %v148 = vsub.f32 %v144, %v147
    %v149 = vmul.f32 %v148, 1.442695
    %v150 = vpow.pop %v149
    %151 = vadd.xlane.f32.xlu0 %v150
    %v152 = vpop.xlane.xlu0 %151
    %v153 = vlog2.pop %v152
    %v154 = vmul.f32 %v153, 0.6931472
    %v155 = vsub.f32 %v148, %v154
    %156 = vst [vmem:[#allocation2] sm:$0xff] %v155
    // Predicated region
    $region14: #{tpu_custom_call.1} parent=1 // pred_check
      _
    $region15: #{tpu_custom_call.1} parent=1 // pred_check_branch
      %158 = sbr.rel (0) target = $region17
    $region16: #{tpu_custom_call.1} parent=1 // pred_region
      %160 = vsyncadd [#allocation3], 0
      %s162 = sshll.u32 [#allocation2], 4
      %s163 = int_to_ptr.vmem [resolvable:$true] %s162
      %s164 = sshll.u32 %s3, 4
      %s165 = int_to_ptr.hbm [resolvable:$true] %s164
      %167 = dma.vmem_to_hbm [thread:$0]  %s163, 128, %s165, [#allocation3]
    $region17: #{tpu_custom_call.1} parent=1 // pred_fallthru
      _
    // Predicated region
    $region18: #{tpu_custom_call.1} parent=1 // pred_check
      _
    $region19: #{tpu_custom_call.1} parent=1 // pred_check_branch
      %169 = sbr.rel (0) target = $region21
    $region20: #{tpu_custom_call.1} parent=1 // pred_region
      %171 = dma.done [#allocation3], 128
    $region21: #{tpu_custom_call.1} parent=1 // pred_fallthru
      _
    %172 = vsyncpa [#allocation3], 1

</llo_original>
